<compile_context>
chip_gen: v7x
topology: tpu7x:2x2x1
jax: 0.10.0
libtpu: 0.0.40
codegen_flags: <defaults>
</compile_context>

<pallas_src>
import jax
import jax.numpy as jnp
from jax.experimental import pallas as pl
from jax.experimental.pallas import tpu as pltpu


def lstm_kernel(x_ref, wih_ref, whh_ref, b_ref, wout_ref, bout_ref, out_ref):
    """Single-layer LSTM forward + last-step Linear head for one batch tile.

    x_ref    : (T, Bt, F)   time-major input tile (bf16)
    wih_ref  : (F, 4H)      fused input->hidden weights, torch gate order i,f,g,o (bf16)
    whh_ref  : (H, 4H)      fused hidden->hidden weights (bf16)
    b_ref    : (1, 4H)      combined bias b_ih + b_hh (f32)
    wout_ref : (H, n_out)   output Linear weight, transposed vs torch (bf16)
    bout_ref : (1, n_out)   output Linear bias (f32)
    out_ref  : (Bt, n_out)  (f32)
    """
    T, B, F = x_ref.shape
    H4 = whh_ref.shape[1]
    H = H4 // 4

    # Hoisted, lane-dense input projection with fused bias: ONE (T*B,F)x(F,4H) MXU pass
    # covering all T steps, entirely off the serial recurrence path. f32 accumulation.
    x2d = x_ref[...].reshape(T * B, F)
    xp = (jnp.dot(x2d, wih_ref[...], preferred_element_type=jnp.float32)
          + b_ref[...]).reshape(T, B, H4)          # (T, B, 4H); gate g lives at lanes [g*H:(g+1)*H]

    whh = whh_ref[...]                              # (H, 4H) bf16, resident in vregs/VMEM

    h = jnp.zeros((B, H), jnp.float32)              # PyTorch default h0 = 0
    c = jnp.zeros((B, H), jnp.float32)              # PyTorch default c0 = 0

    # Fully unrolled time loop (T is small & static): h/c stay in registers; only one
    # lane-dense (B,H)x(H,4H) matmul + 2 EUP launches + cheap VPU/XLU work per step sit on
    # the serial path.
    # TODO(synk): if T grows beyond ~16-32, switch to lax.fori_loop(..., unroll=4..8)
    # carrying (h, c) to bound vreg live ranges.
    for t in range(T):
        pre = xp[t] + jnp.dot(h.astype(whh.dtype), whh,
                              preferred_element_type=jnp.float32)     # (B, 4H) f32
        sig = jax.nn.sigmoid(pre)   # one full-vreg EUP pass covers gates i, f, o
        th = jnp.tanh(pre)          # one full-vreg EUP pass covers gate g
        i_g = sig[:, 0 * H:1 * H]   # static lane slices -> free-ish XLU/VPU extracts
        f_g = sig[:, 1 * H:2 * H]
        g_g = th[:, 2 * H:3 * H]
        o_g = sig[:, 3 * H:4 * H]
        c = f_g * c + i_g * g_g
        h = o_g * jnp.tanh(c)

    # Dropout(p=0.0) on lstm_out[:, -1, :] is the identity -> fused Linear head.
    # (n_out=1 -> masked vst store; pad out width to a multiple of 128 if the head widens.)
    out_ref[...] = (jnp.dot(h.astype(wout_ref.dtype), wout_ref[...],
                            preferred_element_type=jnp.float32)
                    + bout_ref[...]).astype(out_ref.dtype)


def lstm_forward(x, w_ih, w_hh, b_ih, b_hh, w_out, b_out, param_dtype=jnp.bfloat16):
    """x: (B, T, F) batch-first.  Torch-shaped params:
       w_ih (4H, F), w_hh (4H, H), b_ih/b_hh (4H,), w_out (n_out, H), b_out (n_out,)."""
    B, T, F = x.shape
    H = w_hh.shape[1]
    n_out = w_out.shape[0]

    def rup(a, m):
        return -(-a // m) * m

    # Pad batch to 8-sublane granularity and pick a tile size that yields >= 2 tiles
    # whenever the batch allows (so the "parallel" axis actually shards across the 2
    # TensorCores on v7x); cap the tile at 128 sublanes.
    B_pad8 = rup(B, 8)
    B_tile = min(128, max(8, rup(pl.cdiv(B_pad8, 2), 8)))
    B_pad = rup(B_pad8, B_tile)
    n_tiles = B_pad // B_tile

    x_tm = jnp.transpose(x, (1, 0, 2))                              # (T, B, F) time-major
    if B_pad != B:
        x_tm = jnp.pad(x_tm, ((0, 0), (0, B_pad - B), (0, 0)))
    x_tm = x_tm.astype(param_dtype)

    # Fused weight slabs laid out (in, 4H) so output lane g*H + j is gate g, unit j,
    # exactly matching torch's (i, f, g, o) ordering along the 4H axis.
    wih_cat = jnp.transpose(w_ih, (1, 0)).astype(param_dtype)       # (F, 4H)
    whh_cat = jnp.transpose(w_hh, (1, 0)).astype(param_dtype)       # (H, 4H)
    b_cat = (b_ih + b_hh).reshape(1, 4 * H).astype(jnp.float32)     # (1, 4H)
    wout_t = jnp.transpose(w_out).astype(param_dtype)               # (H, n_out)
    bout = b_out.reshape(1, n_out).astype(jnp.float32)              # (1, n_out)

    # Working set at these shapes is a few tens of KB; no vmem_limit_bytes needed. If H/T
    # scale up, tile whh_cat along the 4H axis and set vmem_limit_bytes (v7x: 64 MiB VMEM).
    out = pl.pallas_call(
        lstm_kernel,
        out_shape=jax.ShapeDtypeStruct((B_pad, n_out), jnp.float32),
        grid=(n_tiles,),
        in_specs=[
            pl.BlockSpec((T, B_tile, F), lambda b: (0, b, 0)),      # batch-tiled input
            pl.BlockSpec((F, 4 * H), lambda b: (0, 0)),             # weights stay resident
            pl.BlockSpec((H, 4 * H), lambda b: (0, 0)),
            pl.BlockSpec((1, 4 * H), lambda b: (0, 0)),
            pl.BlockSpec((H, n_out), lambda b: (0, 0)),
            pl.BlockSpec((1, n_out), lambda b: (0, 0)),
        ],
        out_specs=pl.BlockSpec((B_tile, n_out), lambda b: (b, 0)),
        compiler_params=pltpu.CompilerParams(
            dimension_semantics=("parallel",)),                     # shard batch tiles across TCs
    )(x_tm, wih_cat, whh_cat, b_cat, wout_t, bout)

    return out[:B]


def lstm_reference(x, w_ih, w_hh, b_ih, b_hh, w_out, b_out):
    """Pure-JAX f32 reference replicating torch.nn.LSTM(batch_first=True) semantics."""
    B, T, F = x.shape
    H = w_hh.shape[1]
    h = jnp.zeros((B, H), jnp.float32)
    c = jnp.zeros((B, H), jnp.float32)
    for t in range(T):
        gates = x[:, t, :] @ w_ih.T + b_ih + h @ w_hh.T + b_hh
        i_g = jax.nn.sigmoid(gates[:, 0 * H:1 * H])
        f_g = jax.nn.sigmoid(gates[:, 1 * H:2 * H])
        g_g = jnp.tanh(gates[:, 2 * H:3 * H])
        o_g = jax.nn.sigmoid(gates[:, 3 * H:4 * H])
        c = f_g * c + i_g * g_g
        h = o_g * jnp.tanh(c)
    return h @ w_out.T + b_out


if __name__ == "__main__":
    # Small shapes implied by the module: x is (batch, seq, n_feature).
    B, T, F, H, N_OUT = 2, 8, 4, 32, 1

    key = jax.random.PRNGKey(0)
    ks = jax.random.split(key, 7)
    bound = 1.0 / jnp.sqrt(H)  # torch default uniform(-1/sqrt(H), 1/sqrt(H))
    x = jax.random.normal(ks[0], (B, T, F), jnp.float32)
    w_ih = jax.random.uniform(ks[1], (4 * H, F), jnp.float32, -bound, bound)
    w_hh = jax.random.uniform(ks[2], (4 * H, H), jnp.float32, -bound, bound)
    b_ih = jax.random.uniform(ks[3], (4 * H,), jnp.float32, -bound, bound)
    b_hh = jax.random.uniform(ks[4], (4 * H,), jnp.float32, -bound, bound)
    w_out = jax.random.uniform(ks[5], (N_OUT, H), jnp.float32, -bound, bound)
    b_out = jax.random.uniform(ks[6], (N_OUT,), jnp.float32, -bound, bound)

    out = lstm_forward(x, w_ih, w_hh, b_ih, b_hh, w_out, b_out)
    out = jax.block_until_ready(out)

    ref = lstm_reference(x, w_ih, w_hh, b_ih, b_hh, w_out, b_out)
    assert out.shape == (B, N_OUT)
    # bf16 weights/input on the MXU path (f32 accumulation, f32 cell state) -> loosened
    # tolerance vs the pure-f32 reference.
    assert jnp.allclose(out, ref, atol=2e-2, rtol=2e-2), (out, ref)

    # TODO(synk): dropout_rate > 0 (training-mode Dropout RNG) not implemented; p=0.0 is identity.
    print("KERNEL_OK")
</pallas_src>

<mosaic_0001>
module attributes {stable_mosaic.version = 11 : i64} {
  func.func @lstm_kernel(%arg0: i32, %arg1: memref<8x8x4xbf16, #tpu.memory_space<vmem>>, %arg2: memref<4x128xbf16, #tpu.memory_space<vmem>>, %arg3: memref<32x128xbf16, #tpu.memory_space<vmem>>, %arg4: memref<1x128xf32, #tpu.memory_space<vmem>>, %arg5: memref<32x1xbf16, #tpu.memory_space<vmem>>, %arg6: memref<1x1xf32, #tpu.memory_space<vmem>>, %arg7: memref<8x1xf32, #tpu.memory_space<vmem>>) attributes {dimension_semantics = [#tpu.dimension_semantics<parallel>], iteration_bounds = array<i64: 1>, scalar_prefetch = 0 : i64, scratch_operands = 0 : i64, tpu.core_type = #tpu.core_type<tc>, window_params = [{transform_indices = @transform_0, window_bounds = array<i64: 8, 8, 4>}, {pipeline_mode = #tpu.pipeline_mode<synchronous>, transform_indices = @transform_1, window_bounds = array<i64: 4, 128>}, {pipeline_mode = #tpu.pipeline_mode<synchronous>, transform_indices = @transform_2, window_bounds = array<i64: 32, 128>}, {pipeline_mode = #tpu.pipeline_mode<synchronous>, transform_indices = @transform_3, window_bounds = array<i64: 1, 128>}, {pipeline_mode = #tpu.pipeline_mode<synchronous>, transform_indices = @transform_4, window_bounds = array<i64: 32, 1>}, {pipeline_mode = #tpu.pipeline_mode<synchronous>, transform_indices = @transform_5, window_bounds = array<i64: 1, 1>}, {transform_indices = @transform_6, window_bounds = array<i64: 8, 1>}]} {
    %c0 = arith.constant 0 : index
    %c0_0 = arith.constant 0 : index
    %c0_1 = arith.constant 0 : index
    %0 = vector.load %arg1[%c0, %c0_0, %c0_1] : memref<8x8x4xbf16, #tpu.memory_space<vmem>>, vector<8x8x4xbf16>
    %1 = vector.shape_cast %0 : vector<8x8x4xbf16> to vector<64x4xbf16>
    %c0_2 = arith.constant 0 : index
    %c0_3 = arith.constant 0 : index
    %2 = vector.load %arg2[%c0_2, %c0_3] : memref<4x128xbf16, #tpu.memory_space<vmem>>, vector<4x128xbf16>
    %cst = arith.constant dense<0.000000e+00> : vector<64x128xf32>
    %3 = tpu.matmul %1, %2, %cst {dimension_numbers = #tpu.dot_dimension_numbers<[1], [0], [0], [1], [0, 0, 1, 1], [], []>} : vector<64x4xbf16>, vector<4x128xbf16>, vector<64x128xf32> -> vector<64x128xf32>
    %c0_4 = arith.constant 0 : index
    %c0_5 = arith.constant 0 : index
    %4 = vector.load %arg4[%c0_4, %c0_5] : memref<1x128xf32, #tpu.memory_space<vmem>>, vector<1x128xf32>
    %5 = vector.broadcast %4 : vector<1x128xf32> to vector<64x128xf32>
    %6 = arith.addf %3, %5 : vector<64x128xf32>
    %7 = vector.shape_cast %6 : vector<64x128xf32> to vector<8x8x128xf32>
    %c0_6 = arith.constant 0 : index
    %c0_7 = arith.constant 0 : index
    %8 = vector.load %arg3[%c0_6, %c0_7] : memref<32x128xbf16, #tpu.memory_space<vmem>>, vector<32x128xbf16>
    %cst_8 = arith.constant 0.000000e+00 : f32
    %9 = vector.broadcast %cst_8 : f32 to vector<8x32xf32>
    %cst_9 = arith.constant 0.000000e+00 : f32
    %10 = vector.broadcast %cst_9 : f32 to vector<8x32xf32>
    %11 = vector.extract_strided_slice %7 {offsets = [0, 0, 0], sizes = [1, 8, 128], strides = [1, 1, 1]} : vector<8x8x128xf32> to vector<1x8x128xf32>
    %12 = vector.shape_cast %11 : vector<1x8x128xf32> to vector<8x128xf32>
    %13 = arith.truncf %9 : vector<8x32xf32> to vector<8x32xbf16>
    %cst_10 = arith.constant dense<0.000000e+00> : vector<8x128xf32>
    %14 = tpu.matmul %13, %8, %cst_10 {dimension_numbers = #tpu.dot_dimension_numbers<[1], [0], [0], [1], [0, 0, 1, 1], [], []>} : vector<8x32xbf16>, vector<32x128xbf16>, vector<8x128xf32> -> vector<8x128xf32>
    %15 = arith.addf %12, %14 : vector<8x128xf32>
    %16 = arith.negf %15 : vector<8x128xf32>
    %17 = math.exp %16 : vector<8x128xf32>
    %cst_11 = arith.constant 1.000000e+00 : f32
    %18 = vector.broadcast %cst_11 : f32 to vector<8x128xf32>
    %19 = arith.addf %18, %17 : vector<8x128xf32>
    %20 = arith.divf %18, %19 : vector<8x128xf32>
    %21 = math.tanh %15 : vector<8x128xf32>
    %22 = vector.extract_strided_slice %20 {offsets = [0, 0], sizes = [8, 32], strides = [1, 1]} : vector<8x128xf32> to vector<8x32xf32>
    %23 = vector.extract_strided_slice %20 {offsets = [0, 32], sizes = [8, 32], strides = [1, 1]} : vector<8x128xf32> to vector<8x32xf32>
    %24 = vector.extract_strided_slice %21 {offsets = [0, 64], sizes = [8, 32], strides = [1, 1]} : vector<8x128xf32> to vector<8x32xf32>
    %25 = vector.extract_strided_slice %20 {offsets = [0, 96], sizes = [8, 32], strides = [1, 1]} : vector<8x128xf32> to vector<8x32xf32>
    %26 = arith.mulf %23, %10 : vector<8x32xf32>
    %27 = arith.mulf %22, %24 : vector<8x32xf32>
    %28 = arith.addf %26, %27 : vector<8x32xf32>
    %29 = math.tanh %28 : vector<8x32xf32>
    %30 = arith.mulf %25, %29 : vector<8x32xf32>
    %31 = vector.extract_strided_slice %7 {offsets = [1, 0, 0], sizes = [1, 8, 128], strides = [1, 1, 1]} : vector<8x8x128xf32> to vector<1x8x128xf32>
    %32 = vector.shape_cast %31 : vector<1x8x128xf32> to vector<8x128xf32>
    %33 = arith.truncf %30 : vector<8x32xf32> to vector<8x32xbf16>
    %cst_12 = arith.constant dense<0.000000e+00> : vector<8x128xf32>
    %34 = tpu.matmul %33, %8, %cst_12 {dimension_numbers = #tpu.dot_dimension_numbers<[1], [0], [0], [1], [0, 0, 1, 1], [], []>} : vector<8x32xbf16>, vector<32x128xbf16>, vector<8x128xf32> -> vector<8x128xf32>
    %35 = arith.addf %32, %34 : vector<8x128xf32>
    %36 = arith.negf %35 : vector<8x128xf32>
    %37 = math.exp %36 : vector<8x128xf32>
    %cst_13 = arith.constant 1.000000e+00 : f32
    %38 = vector.broadcast %cst_13 : f32 to vector<8x128xf32>
    %39 = arith.addf %38, %37 : vector<8x128xf32>
    %40 = arith.divf %38, %39 : vector<8x128xf32>
    %41 = math.tanh %35 : vector<8x128xf32>
    %42 = vector.extract_strided_slice %40 {offsets = [0, 0], sizes = [8, 32], strides = [1, 1]} : vector<8x128xf32> to vector<8x32xf32>
    %43 = vector.extract_strided_slice %40 {offsets = [0, 32], sizes = [8, 32], strides = [1, 1]} : vector<8x128xf32> to vector<8x32xf32>
    %44 = vector.extract_strided_slice %41 {offsets = [0, 64], sizes = [8, 32], strides = [1, 1]} : vector<8x128xf32> to vector<8x32xf32>
    %45 = vector.extract_strided_slice %40 {offsets = [0, 96], sizes = [8, 32], strides = [1, 1]} : vector<8x128xf32> to vector<8x32xf32>
    %46 = arith.mulf %43, %28 : vector<8x32xf32>
    %47 = arith.mulf %42, %44 : vector<8x32xf32>
    %48 = arith.addf %46, %47 : vector<8x32xf32>
    %49 = math.tanh %48 : vector<8x32xf32>
    %50 = arith.mulf %45, %49 : vector<8x32xf32>
    %51 = vector.extract_strided_slice %7 {offsets = [2, 0, 0], sizes = [1, 8, 128], strides = [1, 1, 1]} : vector<8x8x128xf32> to vector<1x8x128xf32>
    %52 = vector.shape_cast %51 : vector<1x8x128xf32> to vector<8x128xf32>
    %53 = arith.truncf %50 : vector<8x32xf32> to vector<8x32xbf16>
    %cst_14 = arith.constant dense<0.000000e+00> : vector<8x128xf32>
    %54 = tpu.matmul %53, %8, %cst_14 {dimension_numbers = #tpu.dot_dimension_numbers<[1], [0], [0], [1], [0, 0, 1, 1], [], []>} : vector<8x32xbf16>, vector<32x128xbf16>, vector<8x128xf32> -> vector<8x128xf32>
    %55 = arith.addf %52, %54 : vector<8x128xf32>
    %56 = arith.negf %55 : vector<8x128xf32>
    %57 = math.exp %56 : vector<8x128xf32>
    %cst_15 = arith.constant 1.000000e+00 : f32
    %58 = vector.broadcast %cst_15 : f32 to vector<8x128xf32>
    %59 = arith.addf %58, %57 : vector<8x128xf32>
    %60 = arith.divf %58, %59 : vector<8x128xf32>
    %61 = math.tanh %55 : vector<8x128xf32>
    %62 = vector.extract_strided_slice %60 {offsets = [0, 0], sizes = [8, 32], strides = [1, 1]} : vector<8x128xf32> to vector<8x32xf32>
    %63 = vector.extract_strided_slice %60 {offsets = [0, 32], sizes = [8, 32], strides = [1, 1]} : vector<8x128xf32> to vector<8x32xf32>
    %64 = vector.extract_strided_slice %61 {offsets = [0, 64], sizes = [8, 32], strides = [1, 1]} : vector<8x128xf32> to vector<8x32xf32>
    %65 = vector.extract_strided_slice %60 {offsets = [0, 96], sizes = [8, 32], strides = [1, 1]} : vector<8x128xf32> to vector<8x32xf32>
    %66 = arith.mulf %63, %48 : vector<8x32xf32>
    %67 = arith.mulf %62, %64 : vector<8x32xf32>
    %68 = arith.addf %66, %67 : vector<8x32xf32>
    %69 = math.tanh %68 : vector<8x32xf32>
    %70 = arith.mulf %65, %69 : vector<8x32xf32>
    %71 = vector.extract_strided_slice %7 {offsets = [3, 0, 0], sizes = [1, 8, 128], strides = [1, 1, 1]} : vector<8x8x128xf32> to vector<1x8x128xf32>
    %72 = vector.shape_cast %71 : vector<1x8x128xf32> to vector<8x128xf32>
    %73 = arith.truncf %70 : vector<8x32xf32> to vector<8x32xbf16>
    %cst_16 = arith.constant dense<0.000000e+00> : vector<8x128xf32>
    %74 = tpu.matmul %73, %8, %cst_16 {dimension_numbers = #tpu.dot_dimension_numbers<[1], [0], [0], [1], [0, 0, 1, 1], [], []>} : vector<8x32xbf16>, vector<32x128xbf16>, vector<8x128xf32> -> vector<8x128xf32>
    %75 = arith.addf %72, %74 : vector<8x128xf32>
    %76 = arith.negf %75 : vector<8x128xf32>
    %77 = math.exp %76 : vector<8x128xf32>
    %cst_17 = arith.constant 1.000000e+00 : f32
    %78 = vector.broadcast %cst_17 : f32 to vector<8x128xf32>
    %79 = arith.addf %78, %77 : vector<8x128xf32>
    %80 = arith.divf %78, %79 : vector<8x128xf32>
    %81 = math.tanh %75 : vector<8x128xf32>
    %82 = vector.extract_strided_slice %80 {offsets = [0, 0], sizes = [8, 32], strides = [1, 1]} : vector<8x128xf32> to vector<8x32xf32>
    %83 = vector.extract_strided_slice %80 {offsets = [0, 32], sizes = [8, 32], strides = [1, 1]} : vector<8x128xf32> to vector<8x32xf32>
    %84 = vector.extract_strided_slice %81 {offsets = [0, 64], sizes = [8, 32], strides = [1, 1]} : vector<8x128xf32> to vector<8x32xf32>
    %85 = vector.extract_strided_slice %80 {offsets = [0, 96], sizes = [8, 32], strides = [1, 1]} : vector<8x128xf32> to vector<8x32xf32>
    %86 = arith.mulf %83, %68 : vector<8x32xf32>
    %87 = arith.mulf %82, %84 : vector<8x32xf32>
    %88 = arith.addf %86, %87 : vector<8x32xf32>
    %89 = math.tanh %88 : vector<8x32xf32>
    %90 = arith.mulf %85, %89 : vector<8x32xf32>
    %91 = vector.extract_strided_slice %7 {offsets = [4, 0, 0], sizes = [1, 8, 128], strides = [1, 1, 1]} : vector<8x8x128xf32> to vector<1x8x128xf32>
    %92 = vector.shape_cast %91 : vector<1x8x128xf32> to vector<8x128xf32>
    %93 = arith.truncf %90 : vector<8x32xf32> to vector<8x32xbf16>
    %cst_18 = arith.constant dense<0.000000e+00> : vector<8x128xf32>
    %94 = tpu.matmul %93, %8, %cst_18 {dimension_numbers = #tpu.dot_dimension_numbers<[1], [0], [0], [1], [0, 0, 1, 1], [], []>} : vector<8x32xbf16>, vector<32x128xbf16>, vector<8x128xf32> -> vector<8x128xf32>
    %95 = arith.addf %92, %94 : vector<8x128xf32>
    %96 = arith.negf %95 : vector<8x128xf32>
    %97 = math.exp %96 : vector<8x128xf32>
    %cst_19 = arith.constant 1.000000e+00 : f32
    %98 = vector.broadcast %cst_19 : f32 to vector<8x128xf32>
    %99 = arith.addf %98, %97 : vector<8x128xf32>
    %100 = arith.divf %98, %99 : vector<8x128xf32>
    %101 = math.tanh %95 : vector<8x128xf32>
    %102 = vector.extract_strided_slice %100 {offsets = [0, 0], sizes = [8, 32], strides = [1, 1]} : vector<8x128xf32> to vector<8x32xf32>
    %103 = vector.extract_strided_slice %100 {offsets = [0, 32], sizes = [8, 32], strides = [1, 1]} : vector<8x128xf32> to vector<8x32xf32>
    %104 = vector.extract_strided_slice %101 {offsets = [0, 64], sizes = [8, 32], strides = [1, 1]} : vector<8x128xf32> to vector<8x32xf32>
    %105 = vector.extract_strided_slice %100 {offsets = [0, 96], sizes = [8, 32], strides = [1, 1]} : vector<8x128xf32> to vector<8x32xf32>
    %106 = arith.mulf %103, %88 : vector<8x32xf32>
    %107 = arith.mulf %102, %104 : vector<8x32xf32>
    %108 = arith.addf %106, %107 : vector<8x32xf32>
    %109 = math.tanh %108 : vector<8x32xf32>
    %110 = arith.mulf %105, %109 : vector<8x32xf32>
    %111 = vector.extract_strided_slice %7 {offsets = [5, 0, 0], sizes = [1, 8, 128], strides = [1, 1, 1]} : vector<8x8x128xf32> to vector<1x8x128xf32>
    %112 = vector.shape_cast %111 : vector<1x8x128xf32> to vector<8x128xf32>
    %113 = arith.truncf %110 : vector<8x32xf32> to vector<8x32xbf16>
    %cst_20 = arith.constant dense<0.000000e+00> : vector<8x128xf32>
    %114 = tpu.matmul %113, %8, %cst_20 {dimension_numbers = #tpu.dot_dimension_numbers<[1], [0], [0], [1], [0, 0, 1, 1], [], []>} : vector<8x32xbf16>, vector<32x128xbf16>, vector<8x128xf32> -> vector<8x128xf32>
    %115 = arith.addf %112, %114 : vector<8x128xf32>
    %116 = arith.negf %115 : vector<8x128xf32>
    %117 = math.exp %116 : vector<8x128xf32>
    %cst_21 = arith.constant 1.000000e+00 : f32
    %118 = vector.broadcast %cst_21 : f32 to vector<8x128xf32>
    %119 = arith.addf %118, %117 : vector<8x128xf32>
    %120 = arith.divf %118, %119 : vector<8x128xf32>
    %121 = math.tanh %115 : vector<8x128xf32>
    %122 = vector.extract_strided_slice %120 {offsets = [0, 0], sizes = [8, 32], strides = [1, 1]} : vector<8x128xf32> to vector<8x32xf32>
    %123 = vector.extract_strided_slice %120 {offsets = [0, 32], sizes = [8, 32], strides = [1, 1]} : vector<8x128xf32> to vector<8x32xf32>
    %124 = vector.extract_strided_slice %121 {offsets = [0, 64], sizes = [8, 32], strides = [1, 1]} : vector<8x128xf32> to vector<8x32xf32>
    %125 = vector.extract_strided_slice %120 {offsets = [0, 96], sizes = [8, 32], strides = [1, 1]} : vector<8x128xf32> to vector<8x32xf32>
    %126 = arith.mulf %123, %108 : vector<8x32xf32>
    %127 = arith.mulf %122, %124 : vector<8x32xf32>
    %128 = arith.addf %126, %127 : vector<8x32xf32>
    %129 = math.tanh %128 : vector<8x32xf32>
    %130 = arith.mulf %125, %129 : vector<8x32xf32>
    %131 = vector.extract_strided_slice %7 {offsets = [6, 0, 0], sizes = [1, 8, 128], strides = [1, 1, 1]} : vector<8x8x128xf32> to vector<1x8x128xf32>
    %132 = vector.shape_cast %131 : vector<1x8x128xf32> to vector<8x128xf32>
    %133 = arith.truncf %130 : vector<8x32xf32> to vector<8x32xbf16>
    %cst_22 = arith.constant dense<0.000000e+00> : vector<8x128xf32>
    %134 = tpu.matmul %133, %8, %cst_22 {dimension_numbers = #tpu.dot_dimension_numbers<[1], [0], [0], [1], [0, 0, 1, 1], [], []>} : vector<8x32xbf16>, vector<32x128xbf16>, vector<8x128xf32> -> vector<8x128xf32>
    %135 = arith.addf %132, %134 : vector<8x128xf32>
    %136 = arith.negf %135 : vector<8x128xf32>
    %137 = math.exp %136 : vector<8x128xf32>
    %cst_23 = arith.constant 1.000000e+00 : f32
    %138 = vector.broadcast %cst_23 : f32 to vector<8x128xf32>
    %139 = arith.addf %138, %137 : vector<8x128xf32>
    %140 = arith.divf %138, %139 : vector<8x128xf32>
    %141 = math.tanh %135 : vector<8x128xf32>
    %142 = vector.extract_strided_slice %140 {offsets = [0, 0], sizes = [8, 32], strides = [1, 1]} : vector<8x128xf32> to vector<8x32xf32>
    %143 = vector.extract_strided_slice %140 {offsets = [0, 32], sizes = [8, 32], strides = [1, 1]} : vector<8x128xf32> to vector<8x32xf32>
    %144 = vector.extract_strided_slice %141 {offsets = [0, 64], sizes = [8, 32], strides = [1, 1]} : vector<8x128xf32> to vector<8x32xf32>
    %145 = vector.extract_strided_slice %140 {offsets = [0, 96], sizes = [8, 32], strides = [1, 1]} : vector<8x128xf32> to vector<8x32xf32>
    %146 = arith.mulf %143, %128 : vector<8x32xf32>
    %147 = arith.mulf %142, %144 : vector<8x32xf32>
    %148 = arith.addf %146, %147 : vector<8x32xf32>
    %149 = math.tanh %148 : vector<8x32xf32>
    %150 = arith.mulf %145, %149 : vector<8x32xf32>
    %151 = vector.extract_strided_slice %7 {offsets = [7, 0, 0], sizes = [1, 8, 128], strides = [1, 1, 1]} : vector<8x8x128xf32> to vector<1x8x128xf32>
    %152 = vector.shape_cast %151 : vector<1x8x128xf32> to vector<8x128xf32>
    %153 = arith.truncf %150 : vector<8x32xf32> to vector<8x32xbf16>
    %cst_24 = arith.constant dense<0.000000e+00> : vector<8x128xf32>
    %154 = tpu.matmul %153, %8, %cst_24 {dimension_numbers = #tpu.dot_dimension_numbers<[1], [0], [0], [1], [0, 0, 1, 1], [], []>} : vector<8x32xbf16>, vector<32x128xbf16>, vector<8x128xf32> -> vector<8x128xf32>
    %155 = arith.addf %152, %154 : vector<8x128xf32>
    %156 = arith.negf %155 : vector<8x128xf32>
    %157 = math.exp %156 : vector<8x128xf32>
    %cst_25 = arith.constant 1.000000e+00 : f32
    %158 = vector.broadcast %cst_25 : f32 to vector<8x128xf32>
    %159 = arith.addf %158, %157 : vector<8x128xf32>
    %160 = arith.divf %158, %159 : vector<8x128xf32>
    %161 = math.tanh %155 : vector<8x128xf32>
    %162 = vector.extract_strided_slice %160 {offsets = [0, 0], sizes = [8, 32], strides = [1, 1]} : vector<8x128xf32> to vector<8x32xf32>
    %163 = vector.extract_strided_slice %160 {offsets = [0, 32], sizes = [8, 32], strides = [1, 1]} : vector<8x128xf32> to vector<8x32xf32>
    %164 = vector.extract_strided_slice %161 {offsets = [0, 64], sizes = [8, 32], strides = [1, 1]} : vector<8x128xf32> to vector<8x32xf32>
    %165 = vector.extract_strided_slice %160 {offsets = [0, 96], sizes = [8, 32], strides = [1, 1]} : vector<8x128xf32> to vector<8x32xf32>
    %166 = arith.mulf %163, %148 : vector<8x32xf32>
    %167 = arith.mulf %162, %164 : vector<8x32xf32>
    %168 = arith.addf %166, %167 : vector<8x32xf32>
    %169 = math.tanh %168 : vector<8x32xf32>
    %170 = arith.mulf %165, %169 : vector<8x32xf32>
    %171 = arith.truncf %170 : vector<8x32xf32> to vector<8x32xbf16>
    %c0_26 = arith.constant 0 : index
    %c0_27 = arith.constant 0 : index
    %172 = vector.load %arg5[%c0_26, %c0_27] : memref<32x1xbf16, #tpu.memory_space<vmem>>, vector<32x1xbf16>
    %cst_28 = arith.constant dense<0.000000e+00> : vector<8x1xf32>
    %173 = tpu.matmul %171, %172, %cst_28 {dimension_numbers = #tpu.dot_dimension_numbers<[1], [0], [0], [1], [0, 0, 1, 1], [], []>} : vector<8x32xbf16>, vector<32x1xbf16>, vector<8x1xf32> -> vector<8x1xf32>
    %c0_29 = arith.constant 0 : index
    %c0_30 = arith.constant 0 : index
    %174 = vector.load %arg6[%c0_29, %c0_30] : memref<1x1xf32, #tpu.memory_space<vmem>>, vector<1x1xf32>
    %175 = vector.broadcast %174 : vector<1x1xf32> to vector<8x1xf32>
    %176 = arith.addf %173, %175 : vector<8x1xf32>
    %c0_31 = arith.constant 0 : index
    %c0_32 = arith.constant 0 : index
    %177 = vector.load %arg7[%c0_31, %c0_32] : memref<8x1xf32, #tpu.memory_space<vmem>>, vector<8x1xf32>
    tpu.vector_store %arg7[%c0_31, %c0_32], %176 {strides = array<i32>} : memref<8x1xf32, #tpu.memory_space<vmem>>, vector<8x1xf32>,
    return
  }
  func.func @transform_0(%arg0: i32) -> (i32, i32, i32) {
    %c0_i32 = arith.constant 0 : i32
    %c0_i32_0 = arith.constant 0 : i32
    %c0_i32_1 = arith.constant 0 : i32
    return %c0_i32, %arg0, %c0_i32_0 : i32, i32, i32
  }
  func.func @transform_1(%arg0: i32) -> (i32, i32) {
    %c0_i32 = arith.constant 0 : i32
    %c0_i32_0 = arith.constant 0 : i32
    %c0_i32_1 = arith.constant 0 : i32
    return %c0_i32, %c0_i32_0 : i32, i32
  }
  func.func @transform_2(%arg0: i32) -> (i32, i32) {
    %c0_i32 = arith.constant 0 : i32
    %c0_i32_0 = arith.constant 0 : i32
    %c0_i32_1 = arith.constant 0 : i32
    return %c0_i32, %c0_i32_0 : i32, i32
  }
  func.func @transform_3(%arg0: i32) -> (i32, i32) {
    %c0_i32 = arith.constant 0 : i32
    %c0_i32_0 = arith.constant 0 : i32
    %c0_i32_1 = arith.constant 0 : i32
    return %c0_i32, %c0_i32_0 : i32, i32
  }
  func.func @transform_4(%arg0: i32) -> (i32, i32) {
    %c0_i32 = arith.constant 0 : i32
    %c0_i32_0 = arith.constant 0 : i32
    %c0_i32_1 = arith.constant 0 : i32
    return %c0_i32, %c0_i32_0 : i32, i32
  }
  func.func @transform_5(%arg0: i32) -> (i32, i32) {
    %c0_i32 = arith.constant 0 : i32
    %c0_i32_0 = arith.constant 0 : i32
    %c0_i32_1 = arith.constant 0 : i32
    return %c0_i32, %c0_i32_0 : i32, i32
  }
  func.func @transform_6(%arg0: i32) -> (i32, i32) {
    %c0_i32 = arith.constant 0 : i32
    %c0_i32_0 = arith.constant 0 : i32
    return %arg0, %c0_i32 : i32, i32
  }
}

</mosaic_0001>

<llo_original>
// kernel: tpu_custom_call.1
$region0: #{tpu_custom_call.1}
  #allocation0 [shape = 'u32[]', space=smem, size = 0x4, offset = 0x4, fixed_abs, tag = 'smem constant byte address 0x4 - core index']
  #allocation1 [shape = 'u32[144,128]{1,0:T(1,128)}', space=vmem, size = 0x12000, scoped, tag = 'internal scratch']
  #allocation2 [shape = 'f32[1,1]{1,0:T(1,128)S(1)}', space=vmem, size = 0x200, scoped, tag = 'scoped memory for tpu_custom_call.1']
  %s0 = inlined_call_operand.vmem [shape: bf16[8,8,4], index: 0, kind: input, shape index: {}]
  %s1 = inlined_call_operand.vmem [shape: bf16[4,128], index: 1, kind: input, shape index: {}]
  %s2 = inlined_call_operand.vmem [shape: bf16[32,128], index: 2, kind: input, shape index: {}]
  %s3 = inlined_call_operand.vmem [shape: f32[1,128], index: 3, kind: input, shape index: {}]
  %s4 = inlined_call_operand.vmem [shape: bf16[32,1], index: 4, kind: input, shape index: {}]
  %s5 = inlined_call_operand.<no memory space> [shape: f32[1,1], index: 5, kind: input, shape index: {}]
  %s6 = inlined_call_operand.vmem [shape: f32[8,1], index: 6, kind: output, shape index: {}]
  %s7 = sld [smem:[#allocation0]]
  $region34: #{tpu_custom_call.1} parent=0
    _
  %s9 = ssub.s32 1, %s7
  %s10 = scalar_select 0, %s9, %s7
  %v11 = vstv %s5
  %12 = vst [vmem:[#allocation2] sm:$0x1] %v11
  // Predicated region
  $region2: #{tpu_custom_call.1} parent=0 // pred_check
    _
  $region3: #{tpu_custom_call.1} parent=0 // pred_check_branch
    %14 = sbr.rel (0) target = $region5
  $region4: #{tpu_custom_call.1} parent=0 // pred_region
    _
  $region5: #{tpu_custom_call.1} parent=0 // pred_fallthru
    _
  // Predicated region
  $region6: #{tpu_custom_call.1} parent=0 // pred_check
    _
  $region7: #{tpu_custom_call.1} parent=0 // pred_check_branch
    %16 = sbr.rel (0) target = $region9
  $region8: #{tpu_custom_call.1} parent=0 // pred_region
    _
  $region9: #{tpu_custom_call.1} parent=0 // pred_fallthru
    _
  // Predicated region
  $region10: #{tpu_custom_call.1} parent=0 // pred_check
    _
  $region11: #{tpu_custom_call.1} parent=0 // pred_check_branch
    %18 = sbr.rel (0) target = $region13
  $region12: #{tpu_custom_call.1} parent=0 // pred_region
    _
  $region13: #{tpu_custom_call.1} parent=0 // pred_fallthru
    _
  // Predicated region
  $region14: #{tpu_custom_call.1} parent=0 // pred_check
    _
  $region15: #{tpu_custom_call.1} parent=0 // pred_check_branch
    %20 = sbr.rel (0) target = $region17
  $region16: #{tpu_custom_call.1} parent=0 // pred_region
    _
  $region17: #{tpu_custom_call.1} parent=0 // pred_fallthru
    _
  // Predicated region
  $region18: #{tpu_custom_call.1} parent=0 // pred_check
    _
  $region19: #{tpu_custom_call.1} parent=0 // pred_check_branch
    %22 = sbr.rel (0) target = $region21
  $region20: #{tpu_custom_call.1} parent=0 // pred_region
    _
  $region21: #{tpu_custom_call.1} parent=0 // pred_fallthru
    _
  // Predicated region
  $region22: #{tpu_custom_call.1} parent=0 // pred_check
    _
  $region23: #{tpu_custom_call.1} parent=0 // pred_check_branch
    %24 = sbr.rel (0) target = $region25
  $region24: #{tpu_custom_call.1} parent=0 // pred_region
    _
  $region25: #{tpu_custom_call.1} parent=0 // pred_fallthru
    _
  %v26 = vld [vmem:[%s0] sm:$0xf]
  %v27 = vld [vmem:[%s0 + $0x4] sm:$0xf]
  %v28 = vld [vmem:[%s0 + $0x8] sm:$0xf]
  %v29 = vld [vmem:[%s0 + $0xc] sm:$0xf]
  %v30 = vld [vmem:[%s0 + $0x10] sm:$0xf]
  %v31 = vld [vmem:[%s0 + $0x14] sm:$0xf]
  %v32 = vld [vmem:[%s0 + $0x18] sm:$0xf]
  %v33 = vld [vmem:[%s0 + $0x1c] sm:$0xf]
  %v34 = vld [vmem:[%s1] sm:$0x3]
  %v35 = vld [vmem:[%s3] sm:$0x1]
  %v37 = vlaneseq
  %v38 = vshrl.u32 %v37, 7
  %v39 = vsub.s32 0, %v38
  %v40 = vrot.slane %v35, %v39
  %v50 = vunpack.c.l.b16 %v26
  %v51 = vunpack.c.l.b16 %v27
  %v52 = vunpack.c.l.b16 %v28
  %v53 = vunpack.c.l.b16 %v29
  %v54 = vunpack.c.l.b16 %v30
  %v55 = vunpack.c.l.b16 %v31
  %v56 = vunpack.c.l.b16 %v32
  %v57 = vunpack.c.l.b16 %v33
  %v58 = vpack.c.b16 %v51, %v50
  %v59 = vpack.c.b16 %v53, %v52
  %v60 = vpack.c.b16 %v55, %v54
  %v61 = vpack.c.b16 %v57, %v56
  %vm62 = vcmask 31744
  %v64 = vsel %vm62, %v58, 0
  %v67 = vsel %vm62, %v59, 0
  %v70 = vsel %vm62, %v60, 0
  %v73 = vsel %vm62, %v61, 0
  %vm75 = vcmask 1041408
  %v77 = vsel %vm75, %v34, 0
  %79 = vmatprep.subr.bf16.mxu0 0
  %80 = vmatpush1.bf16.msra.mxu0 %v77
  %81 = vmatprep.subr.bf16.mxu0 0
  %82 = vmatpush1.bf16.msra.mxu0 0
  %83 = vmatprep.subr.bf16.mxu0 0
  %84 = vmatpush1.bf16.msra.mxu0 0
  %85 = vmatprep.subr.bf16.mxu0 0
  %86 = vmatpush1.bf16.msra.mxu0 0
  %87 = vmatprep.subr.bf16.mxu0 0
  %88 = vmatpush1.bf16.msra.mxu0 0
  %89 = vmatprep.subr.bf16.mxu0 0
  %90 = vmatpush1.bf16.msra.mxu0 0
  %91 = vmatprep.subr.bf16.mxu0 0
  %92 = vmatpush1.bf16.msra.mxu0 0
  %93 = vmatprep.subr.bf16.mxu0 0
  %94 = vmatpush1.bf16.msra.mxu0 0
  %95 = vmatprep.subr.bf16.mxu0 0
  %96 = vmatpush1.bf16.msra.mxu0 0
  %97 = vmatprep.subr.bf16.mxu0 0
  %98 = vmatpush1.bf16.msra.mxu0 0
  %99 = vmatprep.subr.bf16.mxu0 0
  %100 = vmatpush1.bf16.msra.mxu0 0
  %101 = vmatprep.subr.bf16.mxu0 0
  %102 = vmatpush1.bf16.msra.mxu0 0
  %103 = vmatprep.subr.bf16.mxu0 0
  %104 = vmatpush1.bf16.msra.mxu0 0
  %105 = vmatprep.subr.bf16.mxu0 0
  %106 = vmatpush1.bf16.msra.mxu0 0
  %107 = vmatprep.subr.bf16.mxu0 0
  %108 = vmatpush1.bf16.msra.mxu0 0
  %109 = vmatprep.subr.bf16.mxu0 0
  %110 = vmatpush1.bf16.msra.mxu0 0
  %111 = vmatprep.mubr.bf16.mxu0 0
  %112 = vmatmul.mubr.bf16.gmra.mrb[0].mxu0 %v64
  %v113 = vpop.f32.mrb[0].mxu0
  %v114 = vadd.f32 %v40, %v113
  %v115 = vpop.f32.mrb[0].mxu0
  %v116 = vpop.f32.mrb[0].mxu0
  %v117 = vadd.f32 %v40, %v116
  %v118 = vpop.f32.mrb[0].mxu0
  %119 = vmatprep.mubr.bf16.mxu0 0
  %120 = vmatmul.mubr.bf16.gmra.mrb[0].mxu0 %v67
  %v121 = vpop.f32.mrb[0].mxu0
  %v122 = vadd.f32 %v40, %v121
  %v123 = vpop.f32.mrb[0].mxu0
  %v124 = vpop.f32.mrb[0].mxu0
  %v125 = vadd.f32 %v40, %v124
  %v126 = vpop.f32.mrb[0].mxu0
  %127 = vmatprep.mubr.bf16.mxu0 0
  %128 = vmatmul.mubr.bf16.gmra.mrb[0].mxu0 %v70
  %v129 = vpop.f32.mrb[0].mxu0
  %v130 = vadd.f32 %v40, %v129
  %v131 = vpop.f32.mrb[0].mxu0
  %v132 = vpop.f32.mrb[0].mxu0
  %v133 = vadd.f32 %v40, %v132
  %v134 = vpop.f32.mrb[0].mxu0
  %135 = vmatprep.mubr.bf16.mxu0 0
  %136 = vmatmul.mubr.bf16.gmra.mrb[0].mxu0 %v73
  %v137 = vpop.f32.mrb[0].mxu0
  %v138 = vadd.f32 %v40, %v137
  %v139 = vpop.f32.mrb[0].mxu0
  %v140 = vpop.f32.mrb[0].mxu0
  %v141 = vadd.f32 %v40, %v140
  %v142 = vpop.f32.mrb[0].mxu0
  %143 = vdwg.mxu0
  %v144 = vld [vmem:[%s2] sm:$0xf]
  %v145 = vld [vmem:[%s2 + $0x4] sm:$0xf]
  %v146 = vld [vmem:[%s2 + $0x8] sm:$0xf]
  %v147 = vld [vmem:[%s2 + $0xc] sm:$0xf]
  %v152 = vunpack.c.l.b16 %v144
  %v153 = vunpack.c.l.b16 %v145
  %v154 = vunpack.c.l.b16 %v146
  %v155 = vunpack.c.l.b16 %v147
  %v156 = vpack.c.b16 %v153, %v152
  %v157 = vpack.c.b16 %v155, %v154
  %vm160 = vcmask 261120
  %v162 = vsel %vm160, 0, 0
  %164 = vmatprep.subr.bf16.mxu0 0
  %165 = vmatpush1.bf16.msra.mxu0 %v156
  %166 = vmatprep.subr.bf16.mxu0 0
  %167 = vmatpush1.bf16.msra.mxu0 %v157
  %168 = vmatprep.subr.bf16.mxu0 0
  %169 = vmatpush1.bf16.msra.mxu0 0
  %170 = vmatprep.subr.bf16.mxu0 0
  %171 = vmatpush1.bf16.msra.mxu0 0
  %172 = vmatprep.subr.bf16.mxu0 0
  %173 = vmatpush1.bf16.msra.mxu0 0
  %174 = vmatprep.subr.bf16.mxu0 0
  %175 = vmatpush1.bf16.msra.mxu0 0
  %176 = vmatprep.subr.bf16.mxu0 0
  %177 = vmatpush1.bf16.msra.mxu0 0
  %178 = vmatprep.subr.bf16.mxu0 0
  %179 = vmatpush1.bf16.msra.mxu0 0
  %180 = vmatprep.subr.bf16.mxu0 0
  %181 = vmatpush1.bf16.msra.mxu0 0
  %182 = vmatprep.subr.bf16.mxu0 0
  %183 = vmatpush1.bf16.msra.mxu0 0
  %184 = vmatprep.subr.bf16.mxu0 0
  %185 = vmatpush1.bf16.msra.mxu0 0
  %186 = vmatprep.subr.bf16.mxu0 0
  %187 = vmatpush1.bf16.msra.mxu0 0
  %188 = vmatprep.subr.bf16.mxu0 0
  %189 = vmatpush1.bf16.msra.mxu0 0
  %190 = vmatprep.subr.bf16.mxu0 0
  %191 = vmatpush1.bf16.msra.mxu0 0
  %192 = vmatprep.subr.bf16.mxu0 0
  %193 = vmatpush1.bf16.msra.mxu0 0
  %194 = vmatprep.subr.bf16.mxu0 0
  %195 = vmatpush1.bf16.msra.mxu0 0
  %196 = vmatprep.mubr.bf16.mxu0 0
  %197 = vmatmul.mubr.bf16.gmra.mrb[0].mxu0 %v162
  %v198 = vpop.f32.mrb[0].mxu0
  %v199 = vadd.f32 0.0, %v198
  %v200 = vpop.f32.mrb[0].mxu0
  %v201 = vpop.f32.mrb[0].mxu0
  %v202 = vpop.f32.mrb[0].mxu0
  %203 = vdwg.mxu0
  %v204 = vadd.f32 %v114, %v199
  %v205 = vxor.u32 %v204, 2147483648
  %v206 = vmul.f32 %v205, 1.442695
  %v207 = vpow.pop %v206
  %v208 = vadd.f32 %v207, 1.0
  %v209 = vrcp.pop %v208
  %v210 = vmul.f32 1.0, %v209
  %v211 = vtanh.pop %v204
  %v212 = vmul.f32 %v210, 0.0
  %214 = vrot.lane.b32.xlu0 %v211, 64
  %v215 = vpop.permute.xlu0 %214
  %v217 = vmul.f32 %v210, %v215
  %219 = vrot.lane.b32.xlu0 %v217, 32
  %v220 = vpop.permute.xlu0 %219
  %v222 = vadd.f32 %v212, %v220
  %v223 = vtanh.pop %v222
  %225 = vrot.lane.b32.xlu0 %v223, 64
  %v226 = vpop.permute.xlu0 %225
  %v228 = vmul.f32 %v210, %v226
  %v229 = vpack.c.bf16 %v228, %v228
  %231 = vrot.lane.b32.xlu0 %v229, 32
  %v232 = vpop.permute.xlu0 %231
  %v234 = vsel %vm160, %v232, 0
  %236 = vmatprep.subr.bf16.mxu0 0
  %237 = vmatpush1.bf16.msra.mxu0 %v156
  %238 = vmatprep.subr.bf16.mxu0 0
  %239 = vmatpush1.bf16.msra.mxu0 %v157
  %240 = vmatprep.subr.bf16.mxu0 0
  %241 = vmatpush1.bf16.msra.mxu0 0
  %242 = vmatprep.subr.bf16.mxu0 0
  %243 = vmatpush1.bf16.msra.mxu0 0
  %244 = vmatprep.subr.bf16.mxu0 0
  %245 = vmatpush1.bf16.msra.mxu0 0
  %246 = vmatprep.subr.bf16.mxu0 0
  %247 = vmatpush1.bf16.msra.mxu0 0
  %248 = vmatprep.subr.bf16.mxu0 0
  %249 = vmatpush1.bf16.msra.mxu0 0
  %250 = vmatprep.subr.bf16.mxu0 0
  %251 = vmatpush1.bf16.msra.mxu0 0
  %252 = vmatprep.subr.bf16.mxu0 0
  %253 = vmatpush1.bf16.msra.mxu0 0
  %254 = vmatprep.subr.bf16.mxu0 0
  %255 = vmatpush1.bf16.msra.mxu0 0
  %256 = vmatprep.subr.bf16.mxu0 0
  %257 = vmatpush1.bf16.msra.mxu0 0
  %258 = vmatprep.subr.bf16.mxu0 0
  %259 = vmatpush1.bf16.msra.mxu0 0
  %260 = vmatprep.subr.bf16.mxu0 0
  %261 = vmatpush1.bf16.msra.mxu0 0
  %262 = vmatprep.subr.bf16.mxu0 0
  %263 = vmatpush1.bf16.msra.mxu0 0
  %264 = vmatprep.subr.bf16.mxu0 0
  %265 = vmatpush1.bf16.msra.mxu0 0
  %266 = vmatprep.subr.bf16.mxu0 0
  %267 = vmatpush1.bf16.msra.mxu0 0
  %268 = vmatprep.mubr.bf16.mxu0 0
  %269 = vmatmul.mubr.bf16.gmra.mrb[0].mxu0 %v234
  %v270 = vpop.f32.mrb[0].mxu0
  %v271 = vadd.f32 0.0, %v270
  %v272 = vpop.f32.mrb[0].mxu0
  %v273 = vpop.f32.mrb[0].mxu0
  %v274 = vpop.f32.mrb[0].mxu0
  %275 = vdwg.mxu0
  %v276 = vadd.f32 %v117, %v271
  %v277 = vxor.u32 %v276, 2147483648
  %v278 = vmul.f32 %v277, 1.442695
  %v279 = vpow.pop %v278
  %v280 = vadd.f32 %v279, 1.0
  %v281 = vrcp.pop %v280
  %v282 = vmul.f32 1.0, %v281
  %v283 = vtanh.pop %v276
  %v284 = vmul.f32 %v282, %v222
  %286 = vrot.lane.b32.xlu0 %v283, 64
  %v287 = vpop.permute.xlu0 %286
  %v289 = vmul.f32 %v282, %v287
  %291 = vrot.lane.b32.xlu0 %v289, 32
  %v292 = vpop.permute.xlu0 %291
  %v294 = vadd.f32 %v284, %v292
  %v295 = vtanh.pop %v294
  %297 = vrot.lane.b32.xlu0 %v295, 64
  %v298 = vpop.permute.xlu0 %297
  %v300 = vmul.f32 %v282, %v298
  %v301 = vpack.c.bf16 %v300, %v300
  %303 = vrot.lane.b32.xlu0 %v301, 32
  %v304 = vpop.permute.xlu0 %303
  %v306 = vsel %vm160, %v304, 0
  %308 = vmatprep.subr.bf16.mxu0 0
  %309 = vmatpush1.bf16.msra.mxu0 %v156
  %310 = vmatprep.subr.bf16.mxu0 0
  %311 = vmatpush1.bf16.msra.mxu0 %v157
  %312 = vmatprep.subr.bf16.mxu0 0
  %313 = vmatpush1.bf16.msra.mxu0 0
  %314 = vmatprep.subr.bf16.mxu0 0
  %315 = vmatpush1.bf16.msra.mxu0 0
  %316 = vmatprep.subr.bf16.mxu0 0
  %317 = vmatpush1.bf16.msra.mxu0 0
  %318 = vmatprep.subr.bf16.mxu0 0
  %319 = vmatpush1.bf16.msra.mxu0 0
  %320 = vmatprep.subr.bf16.mxu0 0
  %321 = vmatpush1.bf16.msra.mxu0 0
  %322 = vmatprep.subr.bf16.mxu0 0
  %323 = vmatpush1.bf16.msra.mxu0 0
  %324 = vmatprep.subr.bf16.mxu0 0
  %325 = vmatpush1.bf16.msra.mxu0 0
  %326 = vmatprep.subr.bf16.mxu0 0
  %327 = vmatpush1.bf16.msra.mxu0 0
  %328 = vmatprep.subr.bf16.mxu0 0
  %329 = vmatpush1.bf16.msra.mxu0 0
  %330 = vmatprep.subr.bf16.mxu0 0
  %331 = vmatpush1.bf16.msra.mxu0 0
  %332 = vmatprep.subr.bf16.mxu0 0
  %333 = vmatpush1.bf16.msra.mxu0 0
  %334 = vmatprep.subr.bf16.mxu0 0
  %335 = vmatpush1.bf16.msra.mxu0 0
  %336 = vmatprep.subr.bf16.mxu0 0
  %337 = vmatpush1.bf16.msra.mxu0 0
  %338 = vmatprep.subr.bf16.mxu0 0
  %339 = vmatpush1.bf16.msra.mxu0 0
  %340 = vmatprep.mubr.bf16.mxu0 0
  %341 = vmatmul.mubr.bf16.gmra.mrb[0].mxu0 %v306
  %v342 = vpop.f32.mrb[0].mxu0
  %v343 = vadd.f32 0.0, %v342
  %v344 = vpop.f32.mrb[0].mxu0
  %v345 = vpop.f32.mrb[0].mxu0
  %v346 = vpop.f32.mrb[0].mxu0
  %347 = vdwg.mxu0
  %v348 = vadd.f32 %v122, %v343
  %v349 = vxor.u32 %v348, 2147483648
  %v350 = vmul.f32 %v349, 1.442695
  %v351 = vpow.pop %v350
  %v352 = vadd.f32 %v351, 1.0
  %v353 = vrcp.pop %v352
  %v354 = vmul.f32 1.0, %v353
  %v355 = vtanh.pop %v348
  %v356 = vmul.f32 %v354, %v294
  %358 = vrot.lane.b32.xlu0 %v355, 64
  %v359 = vpop.permute.xlu0 %358
  %v361 = vmul.f32 %v354, %v359
  %363 = vrot.lane.b32.xlu0 %v361, 32
  %v364 = vpop.permute.xlu0 %363
  %v366 = vadd.f32 %v356, %v364
  %v367 = vtanh.pop %v366
  %369 = vrot.lane.b32.xlu0 %v367, 64
  %v370 = vpop.permute.xlu0 %369
  %v372 = vmul.f32 %v354, %v370
  %v373 = vpack.c.bf16 %v372, %v372
  %375 = vrot.lane.b32.xlu0 %v373, 32
  %v376 = vpop.permute.xlu0 %375
  %v378 = vsel %vm160, %v376, 0
  %380 = vmatprep.subr.bf16.mxu0 0
  %381 = vmatpush1.bf16.msra.mxu0 %v156
  %382 = vmatprep.subr.bf16.mxu0 0
  %383 = vmatpush1.bf16.msra.mxu0 %v157
  %384 = vmatprep.subr.bf16.mxu0 0
  %385 = vmatpush1.bf16.msra.mxu0 0
  %386 = vmatprep.subr.bf16.mxu0 0
  %387 = vmatpush1.bf16.msra.mxu0 0
  %388 = vmatprep.subr.bf16.mxu0 0
  %389 = vmatpush1.bf16.msra.mxu0 0
  %390 = vmatprep.subr.bf16.mxu0 0
  %391 = vmatpush1.bf16.msra.mxu0 0
  %392 = vmatprep.subr.bf16.mxu0 0
  %393 = vmatpush1.bf16.msra.mxu0 0
  %394 = vmatprep.subr.bf16.mxu0 0
  %395 = vmatpush1.bf16.msra.mxu0 0
  %396 = vmatprep.subr.bf16.mxu0 0
  %397 = vmatpush1.bf16.msra.mxu0 0
  %398 = vmatprep.subr.bf16.mxu0 0
  %399 = vmatpush1.bf16.msra.mxu0 0
  %400 = vmatprep.subr.bf16.mxu0 0
  %401 = vmatpush1.bf16.msra.mxu0 0
  %402 = vmatprep.subr.bf16.mxu0 0
  %403 = vmatpush1.bf16.msra.mxu0 0
  %404 = vmatprep.subr.bf16.mxu0 0
  %405 = vmatpush1.bf16.msra.mxu0 0
  %406 = vmatprep.subr.bf16.mxu0 0
  %407 = vmatpush1.bf16.msra.mxu0 0
  %408 = vmatprep.subr.bf16.mxu0 0
  %409 = vmatpush1.bf16.msra.mxu0 0
  %410 = vmatprep.subr.bf16.mxu0 0
  %411 = vmatpush1.bf16.msra.mxu0 0
  %412 = vmatprep.mubr.bf16.mxu0 0
  %413 = vmatmul.mubr.bf16.gmra.mrb[0].mxu0 %v378
  %v414 = vpop.f32.mrb[0].mxu0
  %v415 = vadd.f32 0.0, %v414
  %v416 = vpop.f32.mrb[0].mxu0
  %v417 = vpop.f32.mrb[0].mxu0
  %v418 = vpop.f32.mrb[0].mxu0
  %419 = vdwg.mxu0
  %v420 = vadd.f32 %v125, %v415
  %v421 = vxor.u32 %v420, 2147483648
  %v422 = vmul.f32 %v421, 1.442695
  %v423 = vpow.pop %v422
  %v424 = vadd.f32 %v423, 1.0
  %v425 = vrcp.pop %v424
  %v426 = vmul.f32 1.0, %v425
  %v427 = vtanh.pop %v420
  %v428 = vmul.f32 %v426, %v366
  %430 = vrot.lane.b32.xlu0 %v427, 64
  %v431 = vpop.permute.xlu0 %430
  %v433 = vmul.f32 %v426, %v431
  %435 = vrot.lane.b32.xlu0 %v433, 32
  %v436 = vpop.permute.xlu0 %435
  %v438 = vadd.f32 %v428, %v436
  %v439 = vtanh.pop %v438
  %441 = vrot.lane.b32.xlu0 %v439, 64
  %v442 = vpop.permute.xlu0 %441
  %v444 = vmul.f32 %v426, %v442
  %v445 = vpack.c.bf16 %v444, %v444
  %447 = vrot.lane.b32.xlu0 %v445, 32
  %v448 = vpop.permute.xlu0 %447
  %v450 = vsel %vm160, %v448, 0
  %452 = vmatprep.subr.bf16.mxu0 0
  %453 = vmatpush1.bf16.msra.mxu0 %v156
  %454 = vmatprep.subr.bf16.mxu0 0
  %455 = vmatpush1.bf16.msra.mxu0 %v157
  %456 = vmatprep.subr.bf16.mxu0 0
  %457 = vmatpush1.bf16.msra.mxu0 0
  %458 = vmatprep.subr.bf16.mxu0 0
  %459 = vmatpush1.bf16.msra.mxu0 0
  %460 = vmatprep.subr.bf16.mxu0 0
  %461 = vmatpush1.bf16.msra.mxu0 0
  %462 = vmatprep.subr.bf16.mxu0 0
  %463 = vmatpush1.bf16.msra.mxu0 0
  %464 = vmatprep.subr.bf16.mxu0 0
  %465 = vmatpush1.bf16.msra.mxu0 0
  %466 = vmatprep.subr.bf16.mxu0 0
  %467 = vmatpush1.bf16.msra.mxu0 0
  %468 = vmatprep.subr.bf16.mxu0 0
  %469 = vmatpush1.bf16.msra.mxu0 0
  %470 = vmatprep.subr.bf16.mxu0 0
  %471 = vmatpush1.bf16.msra.mxu0 0
  %472 = vmatprep.subr.bf16.mxu0 0
  %473 = vmatpush1.bf16.msra.mxu0 0
  %474 = vmatprep.subr.bf16.mxu0 0
  %475 = vmatpush1.bf16.msra.mxu0 0
  %476 = vmatprep.subr.bf16.mxu0 0
  %477 = vmatpush1.bf16.msra.mxu0 0
  %478 = vmatprep.subr.bf16.mxu0 0
  %479 = vmatpush1.bf16.msra.mxu0 0
  %480 = vmatprep.subr.bf16.mxu0 0
  %481 = vmatpush1.bf16.msra.mxu0 0
  %482 = vmatprep.subr.bf16.mxu0 0
  %483 = vmatpush1.bf16.msra.mxu0 0
  %484 = vmatprep.mubr.bf16.mxu0 0
  %485 = vmatmul.mubr.bf16.gmra.mrb[0].mxu0 %v450
  %v486 = vpop.f32.mrb[0].mxu0
  %v487 = vadd.f32 0.0, %v486
  %v488 = vpop.f32.mrb[0].mxu0
  %v489 = vpop.f32.mrb[0].mxu0
  %v490 = vpop.f32.mrb[0].mxu0
  %491 = vdwg.mxu0
  %v492 = vadd.f32 %v130, %v487
  %v493 = vxor.u32 %v492, 2147483648
  %v494 = vmul.f32 %v493, 1.442695
  %v495 = vpow.pop %v494
  %v496 = vadd.f32 %v495, 1.0
  %v497 = vrcp.pop %v496
  %v498 = vmul.f32 1.0, %v497
  %v499 = vtanh.pop %v492
  %v500 = vmul.f32 %v498, %v438
  %502 = vrot.lane.b32.xlu0 %v499, 64
  %v503 = vpop.permute.xlu0 %502
  %v505 = vmul.f32 %v498, %v503
  %507 = vrot.lane.b32.xlu0 %v505, 32
  %v508 = vpop.permute.xlu0 %507
  %v510 = vadd.f32 %v500, %v508
  %v511 = vtanh.pop %v510
  %513 = vrot.lane.b32.xlu0 %v511, 64
  %v514 = vpop.permute.xlu0 %513
  %v516 = vmul.f32 %v498, %v514
  %v517 = vpack.c.bf16 %v516, %v516
  %519 = vrot.lane.b32.xlu0 %v517, 32
  %v520 = vpop.permute.xlu0 %519
  %v522 = vsel %vm160, %v520, 0
  %524 = vmatprep.subr.bf16.mxu0 0
  %525 = vmatpush1.bf16.msra.mxu0 %v156
  %526 = vmatprep.subr.bf16.mxu0 0
  %527 = vmatpush1.bf16.msra.mxu0 %v157
  %528 = vmatprep.subr.bf16.mxu0 0
  %529 = vmatpush1.bf16.msra.mxu0 0
  %530 = vmatprep.subr.bf16.mxu0 0
  %531 = vmatpush1.bf16.msra.mxu0 0
  %532 = vmatprep.subr.bf16.mxu0 0
  %533 = vmatpush1.bf16.msra.mxu0 0
  %534 = vmatprep.subr.bf16.mxu0 0
  %535 = vmatpush1.bf16.msra.mxu0 0
  %536 = vmatprep.subr.bf16.mxu0 0
  %537 = vmatpush1.bf16.msra.mxu0 0
  %538 = vmatprep.subr.bf16.mxu0 0
  %539 = vmatpush1.bf16.msra.mxu0 0
  %540 = vmatprep.subr.bf16.mxu0 0
  %541 = vmatpush1.bf16.msra.mxu0 0
  %542 = vmatprep.subr.bf16.mxu0 0
  %543 = vmatpush1.bf16.msra.mxu0 0
  %544 = vmatprep.subr.bf16.mxu0 0
  %545 = vmatpush1.bf16.msra.mxu0 0
  %546 = vmatprep.subr.bf16.mxu0 0
  %547 = vmatpush1.bf16.msra.mxu0 0
  %548 = vmatprep.subr.bf16.mxu0 0
  %549 = vmatpush1.bf16.msra.mxu0 0
  %550 = vmatprep.subr.bf16.mxu0 0
  %551 = vmatpush1.bf16.msra.mxu0 0
  %552 = vmatprep.subr.bf16.mxu0 0
  %553 = vmatpush1.bf16.msra.mxu0 0
  %554 = vmatprep.subr.bf16.mxu0 0
  %555 = vmatpush1.bf16.msra.mxu0 0
  %556 = vmatprep.mubr.bf16.mxu0 0
  %557 = vmatmul.mubr.bf16.gmra.mrb[0].mxu0 %v522
  %v558 = vpop.f32.mrb[0].mxu0
  %v559 = vadd.f32 0.0, %v558
  %v560 = vpop.f32.mrb[0].mxu0
  %v561 = vpop.f32.mrb[0].mxu0
  %v562 = vpop.f32.mrb[0].mxu0
  %563 = vdwg.mxu0
  %v564 = vadd.f32 %v133, %v559
  %v565 = vxor.u32 %v564, 2147483648
  %v566 = vmul.f32 %v565, 1.442695
  %v567 = vpow.pop %v566
  %v568 = vadd.f32 %v567, 1.0
  %v569 = vrcp.pop %v568
  %v570 = vmul.f32 1.0, %v569
  %v571 = vtanh.pop %v564
  %v572 = vmul.f32 %v570, %v510
  %574 = vrot.lane.b32.xlu0 %v571, 64
  %v575 = vpop.permute.xlu0 %574
  %v577 = vmul.f32 %v570, %v575
  %579 = vrot.lane.b32.xlu0 %v577, 32
  %v580 = vpop.permute.xlu0 %579
  %v582 = vadd.f32 %v572, %v580
  %v583 = vtanh.pop %v582
  %585 = vrot.lane.b32.xlu0 %v583, 64
  %v586 = vpop.permute.xlu0 %585
  %v588 = vmul.f32 %v570, %v586
  %v589 = vpack.c.bf16 %v588, %v588
  %591 = vrot.lane.b32.xlu0 %v589, 32
  %v592 = vpop.permute.xlu0 %591
  %v594 = vsel %vm160, %v592, 0
  %596 = vmatprep.subr.bf16.mxu0 0
  %597 = vmatpush1.bf16.msra.mxu0 %v156
  %598 = vmatprep.subr.bf16.mxu0 0
  %599 = vmatpush1.bf16.msra.mxu0 %v157
  %600 = vmatprep.subr.bf16.mxu0 0
  %601 = vmatpush1.bf16.msra.mxu0 0
  %602 = vmatprep.subr.bf16.mxu0 0
  %603 = vmatpush1.bf16.msra.mxu0 0
  %604 = vmatprep.subr.bf16.mxu0 0
  %605 = vmatpush1.bf16.msra.mxu0 0
  %606 = vmatprep.subr.bf16.mxu0 0
  %607 = vmatpush1.bf16.msra.mxu0 0
  %608 = vmatprep.subr.bf16.mxu0 0
  %609 = vmatpush1.bf16.msra.mxu0 0
  %610 = vmatprep.subr.bf16.mxu0 0
  %611 = vmatpush1.bf16.msra.mxu0 0
  %612 = vmatprep.subr.bf16.mxu0 0
  %613 = vmatpush1.bf16.msra.mxu0 0
  %614 = vmatprep.subr.bf16.mxu0 0
  %615 = vmatpush1.bf16.msra.mxu0 0
  %616 = vmatprep.subr.bf16.mxu0 0
  %617 = vmatpush1.bf16.msra.mxu0 0
  %618 = vmatprep.subr.bf16.mxu0 0
  %619 = vmatpush1.bf16.msra.mxu0 0
  %620 = vmatprep.subr.bf16.mxu0 0
  %621 = vmatpush1.bf16.msra.mxu0 0
  %622 = vmatprep.subr.bf16.mxu0 0
  %623 = vmatpush1.bf16.msra.mxu0 0
  %624 = vmatprep.subr.bf16.mxu0 0
  %625 = vmatpush1.bf16.msra.mxu0 0
  %626 = vmatprep.subr.bf16.mxu0 0
  %627 = vmatpush1.bf16.msra.mxu0 0
  %628 = vmatprep.mubr.bf16.mxu0 0
  %629 = vmatmul.mubr.bf16.gmra.mrb[0].mxu0 %v594
  %v630 = vpop.f32.mrb[0].mxu0
  %v631 = vadd.f32 0.0, %v630
  %v632 = vpop.f32.mrb[0].mxu0
  %v633 = vpop.f32.mrb[0].mxu0
  %v634 = vpop.f32.mrb[0].mxu0
  %635 = vdwg.mxu0
  %v636 = vadd.f32 %v138, %v631
  %v637 = vxor.u32 %v636, 2147483648
  %v638 = vmul.f32 %v637, 1.442695
  %v639 = vpow.pop %v638
  %v640 = vadd.f32 %v639, 1.0
  %v641 = vrcp.pop %v640
  %v642 = vmul.f32 1.0, %v641
  %v643 = vtanh.pop %v636
  %v644 = vmul.f32 %v642, %v582
  %646 = vrot.lane.b32.xlu0 %v643, 64
  %v647 = vpop.permute.xlu0 %646
  %v649 = vmul.f32 %v642, %v647
  %651 = vrot.lane.b32.xlu0 %v649, 32
  %v652 = vpop.permute.xlu0 %651
  %v654 = vadd.f32 %v644, %v652
  %v655 = vtanh.pop %v654
  %657 = vrot.lane.b32.xlu0 %v655, 64
  %v658 = vpop.permute.xlu0 %657
  %v660 = vmul.f32 %v642, %v658
  %v661 = vpack.c.bf16 %v660, %v660
  %663 = vrot.lane.b32.xlu0 %v661, 32
  %v664 = vpop.permute.xlu0 %663
  %v666 = vsel %vm160, %v664, 0
  %668 = vmatprep.subr.bf16.mxu0 0
  %669 = vmatpush1.bf16.msra.mxu0 %v156
  %670 = vmatprep.subr.bf16.mxu0 0
  %671 = vmatpush1.bf16.msra.mxu0 %v157
  %672 = vmatprep.subr.bf16.mxu0 0
  %673 = vmatpush1.bf16.msra.mxu0 0
  %674 = vmatprep.subr.bf16.mxu0 0
  %675 = vmatpush1.bf16.msra.mxu0 0
  %676 = vmatprep.subr.bf16.mxu0 0
  %677 = vmatpush1.bf16.msra.mxu0 0
  %678 = vmatprep.subr.bf16.mxu0 0
  %679 = vmatpush1.bf16.msra.mxu0 0
  %680 = vmatprep.subr.bf16.mxu0 0
  %681 = vmatpush1.bf16.msra.mxu0 0
  %682 = vmatprep.subr.bf16.mxu0 0
  %683 = vmatpush1.bf16.msra.mxu0 0
  %684 = vmatprep.subr.bf16.mxu0 0
  %685 = vmatpush1.bf16.msra.mxu0 0
  %686 = vmatprep.subr.bf16.mxu0 0
  %687 = vmatpush1.bf16.msra.mxu0 0
  %688 = vmatprep.subr.bf16.mxu0 0
  %689 = vmatpush1.bf16.msra.mxu0 0
  %690 = vmatprep.subr.bf16.mxu0 0
  %691 = vmatpush1.bf16.msra.mxu0 0
  %692 = vmatprep.subr.bf16.mxu0 0
  %693 = vmatpush1.bf16.msra.mxu0 0
  %694 = vmatprep.subr.bf16.mxu0 0
  %695 = vmatpush1.bf16.msra.mxu0 0
  %696 = vmatprep.subr.bf16.mxu0 0
  %697 = vmatpush1.bf16.msra.mxu0 0
  %698 = vmatprep.subr.bf16.mxu0 0
  %699 = vmatpush1.bf16.msra.mxu0 0
  %700 = vmatprep.mubr.bf16.mxu0 0
  %701 = vmatmul.mubr.bf16.gmra.mrb[0].mxu0 %v666
  %v702 = vpop.f32.mrb[0].mxu0
  %v703 = vadd.f32 0.0, %v702
  %v704 = vpop.f32.mrb[0].mxu0
  %v705 = vpop.f32.mrb[0].mxu0
  %v706 = vpop.f32.mrb[0].mxu0
  %707 = vdwg.mxu0
  %v708 = vadd.f32 %v141, %v703
  %v709 = vxor.u32 %v708, 2147483648
  %v710 = vmul.f32 %v709, 1.442695
  %v711 = vpow.pop %v710
  %v712 = vadd.f32 %v711, 1.0
  %v713 = vrcp.pop %v712
  %v714 = vmul.f32 1.0, %v713
  %v715 = vtanh.pop %v708
  %v716 = vmul.f32 %v714, %v654
  %718 = vrot.lane.b32.xlu0 %v715, 64
  %v719 = vpop.permute.xlu0 %718
  %v721 = vmul.f32 %v714, %v719
  %723 = vrot.lane.b32.xlu0 %v721, 32
  %v724 = vpop.permute.xlu0 %723
  %v726 = vadd.f32 %v716, %v724
  %v727 = vtanh.pop %v726
  %729 = vrot.lane.b32.xlu0 %v727, 64
  %v730 = vpop.permute.xlu0 %729
  %v732 = vmul.f32 %v714, %v730
  %v733 = vpack.c.bf16 %v732, %v732
  %v734 = vld [vmem:[%s4] sm:$0xf]
  %v735 = vld [vmem:[%s4 + $0x4] sm:$0xf]
  %v736 = vld [vmem:[%s4 + $0x8] sm:$0xf]
  %v737 = vld [vmem:[%s4 + $0xc] sm:$0xf]
  %v738 = vld [vmem:[#allocation2] sm:$0x1]
  %v740 = vlaneseq
  %v741 = vshrl.u32 %v740, 7
  %v742 = vsub.s32 0, %v741
  %v743 = vrot.slane %v738, %v742
  %746 = vrot.lane.b32.xlu0 %v733, 32
  %v747 = vpop.permute.xlu0 %746
  %v752 = vunpack.c.l.b16 %v734
  %v753 = vunpack.c.l.b16 %v735
  %v754 = vunpack.c.l.b16 %v736
  %v755 = vunpack.c.l.b16 %v737
  %v756 = vpack.c.b16 %v753, %v752
  %v757 = vpack.c.b16 %v755, %v754
  %v761 = vsel %vm160, %v747, 0
  %763 = vmatprep.subr.bf16.mxu0 0
  %764 = vmatpush1.bf16.msra.mxu0 %v756
  %765 = vmatprep.subr.bf16.mxu0 0
  %766 = vmatpush1.bf16.msra.mxu0 %v757
  %767 = vmatprep.subr.bf16.mxu0 0
  %768 = vmatpush1.bf16.msra.mxu0 0
  %769 = vmatprep.subr.bf16.mxu0 0
  %770 = vmatpush1.bf16.msra.mxu0 0
  %771 = vmatprep.subr.bf16.mxu0 0
  %772 = vmatpush1.bf16.msra.mxu0 0
  %773 = vmatprep.subr.bf16.mxu0 0
  %774 = vmatpush1.bf16.msra.mxu0 0
  %775 = vmatprep.subr.bf16.mxu0 0
  %776 = vmatpush1.bf16.msra.mxu0 0
  %777 = vmatprep.subr.bf16.mxu0 0
  %778 = vmatpush1.bf16.msra.mxu0 0
  %779 = vmatprep.subr.bf16.mxu0 0
  %780 = vmatpush1.bf16.msra.mxu0 0
  %781 = vmatprep.subr.bf16.mxu0 0
  %782 = vmatpush1.bf16.msra.mxu0 0
  %783 = vmatprep.subr.bf16.mxu0 0
  %784 = vmatpush1.bf16.msra.mxu0 0
  %785 = vmatprep.subr.bf16.mxu0 0
  %786 = vmatpush1.bf16.msra.mxu0 0
  %787 = vmatprep.subr.bf16.mxu0 0
  %788 = vmatpush1.bf16.msra.mxu0 0
  %789 = vmatprep.subr.bf16.mxu0 0
  %790 = vmatpush1.bf16.msra.mxu0 0
  %791 = vmatprep.subr.bf16.mxu0 0
  %792 = vmatpush1.bf16.msra.mxu0 0
  %793 = vmatprep.subr.bf16.mxu0 0
  %794 = vmatpush1.bf16.msra.mxu0 0
  %795 = vmatprep.mubr.bf16.mxu0 0
  %796 = vmatmul.mubr.bf16.gmra.mrb[0].mxu0 %v761
  %v797 = vpop.f32.mrb[0].mxu0
  %v798 = vadd.f32 %v743, %v797
  %v799 = vpop.f32.mrb[0].mxu0
  %v800 = vpop.f32.mrb[0].mxu0
  %v801 = vpop.f32.mrb[0].mxu0
  %802 = vdwg.mxu0
  %vm803 = vcmask 7168
  %804 = vst.msk [vmem:[%s6] sm:$0xff] %vm803, %v798
  // Predicated region
  $region26: #{tpu_custom_call.1} parent=0 // pred_check
    _
  $region27: #{tpu_custom_call.1} parent=0 // pred_check_branch
    %806 = sbr.rel (0) target = $region29
  $region28: #{tpu_custom_call.1} parent=0 // pred_region
    _
  $region29: #{tpu_custom_call.1} parent=0 // pred_fallthru
    _
  // Predicated region
  $region30: #{tpu_custom_call.1} parent=0 // pred_check
    _
  $region31: #{tpu_custom_call.1} parent=0 // pred_check_branch
    %808 = sbr.rel (0) target = $region33
  $region32: #{tpu_custom_call.1} parent=0 // pred_region
    _
  $region33: #{tpu_custom_call.1} parent=0 // pred_fallthru
    _

</llo_original>
